<compile_context>
chip_gen: v7x
topology: tpu7x:2x2x1
jax: 0.10.0
libtpu: 0.0.40
codegen_flags: <defaults>
</compile_context>

<pallas_src>
import math
import jax
import jax.numpy as jnp
from jax import lax
from jax.experimental import pallas as pl
from jax.experimental.pallas import tpu as pltpu


# --------------------- stage 1: combine = X @ W^T (F.linear) ---------------------

def _combine_kernel(x_ref, w_ref, c_ref):
    # F.linear(x, W) == x @ W^T : contract last dim of x with last dim of W.
    c_ref[...] = lax.dot_general(
        x_ref[...], w_ref[...],
        dimension_numbers=(((1,), (1,)), ((), ())),
        preferred_element_type=jnp.float32,
    ).astype(c_ref.dtype)


# --------------------- stage 2: adj = sigmoid(C @ C^T), tiled ---------------------

def _adj_kernel(ci_ref, cj_ref, o_ref):
    # logits = C_i @ C_j^T as a contraction on dim 1 of both operands
    # (no explicit transpose/relayout of the C_j tile).
    logits = lax.dot_general(
        ci_ref[...], cj_ref[...],
        dimension_numbers=(((1,), (1,)), ((), ())),
        preferred_element_type=jnp.float32,
    )
    # Single-transcendental sigmoid: sigmoid(x) == 0.5 * tanh(0.5 * x) + 0.5
    o_ref[...] = (0.5 * jnp.tanh(0.5 * logits) + 0.5).astype(o_ref.dtype)


def _tile(n: int, cap: int) -> int:
    # Full-extent block when the array is smaller than the cap (always legal),
    # otherwise a fixed well-aligned tile; cdiv grids + masked ragged tail
    # handle any N.
    return n if n <= cap else cap


def decoder_forward(node_embed: jax.Array, de_weight: jax.Array) -> jax.Array:
    """node_embed: (N, nhid) f32, de_weight: (nhid, nhid) f32 -> (N, N) f32."""
    n, nhid = node_embed.shape
    assert de_weight.shape == (nhid, nhid)

    # ---- stage 1: combine = X @ W^T (single step for any realistic N) ----
    tm1 = _tile(n, 8192)            # 8192x32 f32 tile = 1 MiB; grid=(1,) when N<=8192
    g1 = pl.cdiv(n, tm1)
    combine = pl.pallas_call(
        _combine_kernel,
        out_shape=jax.ShapeDtypeStruct((n, nhid), jnp.float32),
        grid_spec=pltpu.PrefetchScalarGridSpec(
            num_scalar_prefetch=0,
            grid=(g1,),
            in_specs=[
                pl.BlockSpec((tm1, nhid), lambda i: (i, 0)),
                pl.BlockSpec((nhid, nhid), lambda i: (0, 0)),
            ],
            out_specs=pl.BlockSpec((tm1, nhid), lambda i: (i, 0)),
        ),
        compiler_params=pltpu.CompilerParams(
            dimension_semantics=("parallel",),
            vmem_limit_bytes=32 * 1024 * 1024),
        cost_estimate=pl.CostEstimate(
            flops=2 * n * nhid * nhid,
            transcendentals=0,
            bytes_accessed=4 * (2 * n * nhid + g1 * nhid * nhid)),
    )(node_embed, de_weight)

    # ---- stage 2: adj = sigmoid(C @ C^T), tiled over the (N, N) output ----
    tm = _tile(n, 512)              # row tile
    tn = _tile(n, 2048)             # lane-dense column tile (out tile = 4 MiB f32)
    gi, gj = pl.cdiv(n, tm), pl.cdiv(n, tn)

    adj = pl.pallas_call(
        _adj_kernel,
        out_shape=jax.ShapeDtypeStruct((n, n), jnp.float32),
        grid_spec=pltpu.PrefetchScalarGridSpec(
            num_scalar_prefetch=0,
            grid=(gi, gj),
            in_specs=[
                pl.BlockSpec((tm, nhid), lambda i, j: (i, 0)),  # C row-block i
                pl.BlockSpec((tn, nhid), lambda i, j: (j, 0)),  # C row-block j
            ],
            out_specs=pl.BlockSpec((tm, tn), lambda i, j: (i, j)),
        ),
        compiler_params=pltpu.CompilerParams(
            dimension_semantics=("parallel", "parallel"),
            vmem_limit_bytes=32 * 1024 * 1024),
        cost_estimate=pl.CostEstimate(
            flops=2 * n * n * nhid,
            transcendentals=n * n,
            # includes the per-tile re-fetch of C_i and C_j blocks + the write
            bytes_accessed=4 * (gi * gj * (tm + tn) * nhid + n * n)),
    )(combine, combine)

    return adj


def init_de_weight(key, nhid: int) -> jax.Array:
    # Matches reset_parameters: uniform(-stdv, stdv), stdv = 1/sqrt(nhid)
    stdv = 1.0 / math.sqrt(nhid)
    return jax.random.uniform(key, (nhid, nhid), jnp.float32, -stdv, stdv)


def decoder_reference(node_embed, de_weight):
    combine = node_embed @ de_weight.T
    return jax.nn.sigmoid(combine @ combine.T)


if __name__ == "__main__":
    key = jax.random.PRNGKey(0)
    k_x, k_w = jax.random.split(key)

    NHID = 32
    de_weight = init_de_weight(k_w, NHID)

    # Small demo shape (divides the tiles exactly) ...
    N = 512
    node_embed = jax.random.normal(k_x, (N, NHID), jnp.float32)
    adj_out = jax.block_until_ready(decoder_forward(node_embed, de_weight))
    ref = decoder_reference(node_embed, de_weight)
    assert adj_out.shape == (N, N)
    assert jnp.allclose(adj_out, ref, atol=5e-5, rtol=1e-4), "mismatch vs reference (N=512)"

    # ... and a ragged shape that exercises the cdiv / masked-tail path.
    N2 = 640
    node_embed2 = jax.random.normal(k_x, (N2, NHID), jnp.float32)
    adj_out2 = jax.block_until_ready(decoder_forward(node_embed2, de_weight))
    ref2 = decoder_reference(node_embed2, de_weight)
    assert adj_out2.shape == (N2, N2)
    assert jnp.allclose(adj_out2, ref2, atol=5e-5, rtol=1e-4), "mismatch vs reference (N=640)"

    print("KERNEL_OK")
</pallas_src>

<mosaic_0001>
module attributes {stable_mosaic.version = 11 : i64} {
  func.func @_combine_kernel(%arg0: i32, %arg1: memref<512x32xf32, #tpu.memory_space<vmem>>, %arg2: memref<32x32xf32, #tpu.memory_space<vmem>>, %arg3: memref<512x32xf32, #tpu.memory_space<vmem>>) attributes {dimension_semantics = [#tpu.dimension_semantics<parallel>], iteration_bounds = array<i64: 1>, scalar_prefetch = 0 : i64, scratch_operands = 0 : i64, tpu.core_type = #tpu.core_type<tc>, window_params = [{transform_indices = @transform_0, window_bounds = array<i64: 512, 32>}, {pipeline_mode = #tpu.pipeline_mode<synchronous>, transform_indices = @transform_1, window_bounds = array<i64: 32, 32>}, {transform_indices = @transform_2, window_bounds = array<i64: 512, 32>}]} {
    %c0 = arith.constant 0 : index
    %c0_0 = arith.constant 0 : index
    %0 = vector.load %arg1[%c0, %c0_0] : memref<512x32xf32, #tpu.memory_space<vmem>>, vector<512x32xf32>
    %c0_1 = arith.constant 0 : index
    %c0_2 = arith.constant 0 : index
    %1 = vector.load %arg2[%c0_1, %c0_2] : memref<32x32xf32, #tpu.memory_space<vmem>>, vector<32x32xf32>
    %cst = arith.constant dense<0.000000e+00> : vector<512x32xf32>
    %2 = tpu.matmul %0, %1, %cst {dimension_numbers = #tpu.dot_dimension_numbers<[1], [1], [0], [0], [0, 0, 1, 0], [], []>} : vector<512x32xf32>, vector<32x32xf32>, vector<512x32xf32> -> vector<512x32xf32>
    %c0_3 = arith.constant 0 : index
    %c0_4 = arith.constant 0 : index
    %3 = vector.load %arg3[%c0_3, %c0_4] : memref<512x32xf32, #tpu.memory_space<vmem>>, vector<512x32xf32>
    tpu.vector_store %arg3[%c0_3, %c0_4], %2 {strides = array<i32>} : memref<512x32xf32, #tpu.memory_space<vmem>>, vector<512x32xf32>,
    return
  }
  func.func @transform_0(%arg0: i32) -> (i32, i32) {
    %c0_i32 = arith.constant 0 : i32
    %c0_i32_0 = arith.constant 0 : i32
    return %arg0, %c0_i32 : i32, i32
  }
  func.func @transform_1(%arg0: i32) -> (i32, i32) {
    %c0_i32 = arith.constant 0 : i32
    %c0_i32_0 = arith.constant 0 : i32
    %c0_i32_1 = arith.constant 0 : i32
    return %c0_i32, %c0_i32_0 : i32, i32
  }
  func.func @transform_2(%arg0: i32) -> (i32, i32) {
    %c0_i32 = arith.constant 0 : i32
    %c0_i32_0 = arith.constant 0 : i32
    return %arg0, %c0_i32 : i32, i32
  }
}

</mosaic_0001>

<llo_original>
// kernel: tpu_custom_call.1
$region0: #{tpu_custom_call.1}
  #allocation0 [shape = 'u32[]', space=smem, size = 0x4, offset = 0x4, fixed_abs, tag = 'smem constant byte address 0x4 - core index']
  #allocation1 [shape = 'u32[144,128]{1,0:T(1,128)}', space=vmem, size = 0x12000, scoped, tag = 'internal scratch']
  %s0 = inlined_call_operand.vmem [shape: f32[512,32], index: 0, kind: input, shape index: {}]
  %s1 = inlined_call_operand.vmem [shape: f32[32,32], index: 1, kind: input, shape index: {}]
  %s2 = inlined_call_operand.vmem [shape: f32[512,32], index: 2, kind: output, shape index: {}]
  %s3 = sld [smem:[#allocation0]]
  $region18: #{tpu_custom_call.1} parent=0
    _
  %s5 = ssub.s32 1, %s3
  %s6 = scalar_select 0, %s5, %s3
  // Predicated region
  $region2: #{tpu_custom_call.1} parent=0 // pred_check
    _
  $region3: #{tpu_custom_call.1} parent=0 // pred_check_branch
    %8 = sbr.rel (0) target = $region5
  $region4: #{tpu_custom_call.1} parent=0 // pred_region
    _
  $region5: #{tpu_custom_call.1} parent=0 // pred_fallthru
    _
  // Predicated region
  $region6: #{tpu_custom_call.1} parent=0 // pred_check
    _
  $region7: #{tpu_custom_call.1} parent=0 // pred_check_branch
    %10 = sbr.rel (0) target = $region9
  $region8: #{tpu_custom_call.1} parent=0 // pred_region
    _
  $region9: #{tpu_custom_call.1} parent=0 // pred_fallthru
    _
  %v11 = vld [vmem:[%s0] sm:$0xff]
  %v12 = vld [vmem:[%s0 + $0x8] sm:$0xff]
  %v13 = vld [vmem:[%s0 + $0x10] sm:$0xff]
  %v14 = vld [vmem:[%s0 + $0x18] sm:$0xff]
  %v15 = vld [vmem:[%s0 + $0x20] sm:$0xff]
  %v16 = vld [vmem:[%s0 + $0x28] sm:$0xff]
  %v17 = vld [vmem:[%s0 + $0x30] sm:$0xff]
  %v18 = vld [vmem:[%s0 + $0x38] sm:$0xff]
  %v19 = vld [vmem:[%s0 + $0x40] sm:$0xff]
  %v20 = vld [vmem:[%s0 + $0x48] sm:$0xff]
  %v21 = vld [vmem:[%s0 + $0x50] sm:$0xff]
  %v22 = vld [vmem:[%s0 + $0x58] sm:$0xff]
  %v23 = vld [vmem:[%s0 + $0x60] sm:$0xff]
  %v24 = vld [vmem:[%s0 + $0x68] sm:$0xff]
  %v25 = vld [vmem:[%s0 + $0x70] sm:$0xff]
  %v26 = vld [vmem:[%s0 + $0x78] sm:$0xff]
  %v27 = vld [vmem:[%s0 + $0x80] sm:$0xff]
  %v28 = vld [vmem:[%s0 + $0x88] sm:$0xff]
  %v29 = vld [vmem:[%s0 + $0x90] sm:$0xff]
  %v30 = vld [vmem:[%s0 + $0x98] sm:$0xff]
  %v31 = vld [vmem:[%s0 + $0xa0] sm:$0xff]
  %v32 = vld [vmem:[%s0 + $0xa8] sm:$0xff]
  %v33 = vld [vmem:[%s0 + $0xb0] sm:$0xff]
  %v34 = vld [vmem:[%s0 + $0xb8] sm:$0xff]
  %v35 = vld [vmem:[%s0 + $0xc0] sm:$0xff]
  %v36 = vld [vmem:[%s0 + $0xc8] sm:$0xff]
  %v37 = vld [vmem:[%s0 + $0xd0] sm:$0xff]
  %v38 = vld [vmem:[%s0 + $0xd8] sm:$0xff]
  %v39 = vld [vmem:[%s0 + $0xe0] sm:$0xff]
  %v40 = vld [vmem:[%s0 + $0xe8] sm:$0xff]
  %v41 = vld [vmem:[%s0 + $0xf0] sm:$0xff]
  %v42 = vld [vmem:[%s0 + $0xf8] sm:$0xff]
  %v43 = vld [vmem:[%s0 + $0x100] sm:$0xff]
  %v44 = vld [vmem:[%s0 + $0x108] sm:$0xff]
  %v45 = vld [vmem:[%s0 + $0x110] sm:$0xff]
  %v46 = vld [vmem:[%s0 + $0x118] sm:$0xff]
  %v47 = vld [vmem:[%s0 + $0x120] sm:$0xff]
  %v48 = vld [vmem:[%s0 + $0x128] sm:$0xff]
  %v49 = vld [vmem:[%s0 + $0x130] sm:$0xff]
  %v50 = vld [vmem:[%s0 + $0x138] sm:$0xff]
  %v51 = vld [vmem:[%s0 + $0x140] sm:$0xff]
  %v52 = vld [vmem:[%s0 + $0x148] sm:$0xff]
  %v53 = vld [vmem:[%s0 + $0x150] sm:$0xff]
  %v54 = vld [vmem:[%s0 + $0x158] sm:$0xff]
  %v55 = vld [vmem:[%s0 + $0x160] sm:$0xff]
  %v56 = vld [vmem:[%s0 + $0x168] sm:$0xff]
  %v57 = vld [vmem:[%s0 + $0x170] sm:$0xff]
  %v58 = vld [vmem:[%s0 + $0x178] sm:$0xff]
  %v59 = vld [vmem:[%s0 + $0x180] sm:$0xff]
  %v60 = vld [vmem:[%s0 + $0x188] sm:$0xff]
  %v61 = vld [vmem:[%s0 + $0x190] sm:$0xff]
  %v62 = vld [vmem:[%s0 + $0x198] sm:$0xff]
  %v63 = vld [vmem:[%s0 + $0x1a0] sm:$0xff]
  %v64 = vld [vmem:[%s0 + $0x1a8] sm:$0xff]
  %v65 = vld [vmem:[%s0 + $0x1b0] sm:$0xff]
  %v66 = vld [vmem:[%s0 + $0x1b8] sm:$0xff]
  %v67 = vld [vmem:[%s0 + $0x1c0] sm:$0xff]
  %v68 = vld [vmem:[%s0 + $0x1c8] sm:$0xff]
  %v69 = vld [vmem:[%s0 + $0x1d0] sm:$0xff]
  %v70 = vld [vmem:[%s0 + $0x1d8] sm:$0xff]
  %v71 = vld [vmem:[%s0 + $0x1e0] sm:$0xff]
  %v72 = vld [vmem:[%s0 + $0x1e8] sm:$0xff]
  %v73 = vld [vmem:[%s0 + $0x1f0] sm:$0xff]
  %v74 = vld [vmem:[%s0 + $0x1f8] sm:$0xff]
  %v75 = vld [vmem:[%s1] sm:$0xff]
  %v76 = vld [vmem:[%s1 + $0x8] sm:$0xff]
  %v77 = vld [vmem:[%s1 + $0x10] sm:$0xff]
  %v78 = vld [vmem:[%s1 + $0x18] sm:$0xff]
  %vm79 = vcmask 261120
  %v81 = vsel %vm79, %v11, 0
  %v84 = vsel %vm79, %v12, 0
  %v87 = vsel %vm79, %v13, 0
  %v90 = vsel %vm79, %v14, 0
  %v93 = vsel %vm79, %v15, 0
  %v96 = vsel %vm79, %v16, 0
  %v99 = vsel %vm79, %v17, 0
  %v102 = vsel %vm79, %v18, 0
  %v105 = vsel %vm79, %v19, 0
  %v108 = vsel %vm79, %v20, 0
  %v111 = vsel %vm79, %v21, 0
  %v114 = vsel %vm79, %v22, 0
  %v117 = vsel %vm79, %v23, 0
  %v120 = vsel %vm79, %v24, 0
  %v123 = vsel %vm79, %v25, 0
  %v126 = vsel %vm79, %v26, 0
  %v129 = vsel %vm79, %v27, 0
  %v132 = vsel %vm79, %v28, 0
  %v135 = vsel %vm79, %v29, 0
  %v138 = vsel %vm79, %v30, 0
  %v141 = vsel %vm79, %v31, 0
  %v144 = vsel %vm79, %v32, 0
  %v147 = vsel %vm79, %v33, 0
  %v150 = vsel %vm79, %v34, 0
  %v153 = vsel %vm79, %v35, 0
  %v156 = vsel %vm79, %v36, 0
  %v159 = vsel %vm79, %v37, 0
  %v162 = vsel %vm79, %v38, 0
  %v165 = vsel %vm79, %v39, 0
  %v168 = vsel %vm79, %v40, 0
  %v171 = vsel %vm79, %v41, 0
  %v174 = vsel %vm79, %v42, 0
  %v177 = vsel %vm79, %v43, 0
  %v180 = vsel %vm79, %v44, 0
  %v183 = vsel %vm79, %v45, 0
  %v186 = vsel %vm79, %v46, 0
  %v189 = vsel %vm79, %v47, 0
  %v192 = vsel %vm79, %v48, 0
  %v195 = vsel %vm79, %v49, 0
  %v198 = vsel %vm79, %v50, 0
  %v201 = vsel %vm79, %v51, 0
  %v204 = vsel %vm79, %v52, 0
  %v207 = vsel %vm79, %v53, 0
  %v210 = vsel %vm79, %v54, 0
  %v213 = vsel %vm79, %v55, 0
  %v216 = vsel %vm79, %v56, 0
  %v219 = vsel %vm79, %v57, 0
  %v222 = vsel %vm79, %v58, 0
  %v225 = vsel %vm79, %v59, 0
  %v228 = vsel %vm79, %v60, 0
  %v231 = vsel %vm79, %v61, 0
  %v234 = vsel %vm79, %v62, 0
  %v237 = vsel %vm79, %v63, 0
  %v240 = vsel %vm79, %v64, 0
  %v243 = vsel %vm79, %v65, 0
  %v246 = vsel %vm79, %v66, 0
  %v249 = vsel %vm79, %v67, 0
  %v252 = vsel %vm79, %v68, 0
  %v255 = vsel %vm79, %v69, 0
  %v258 = vsel %vm79, %v70, 0
  %v261 = vsel %vm79, %v71, 0
  %v264 = vsel %vm79, %v72, 0
  %v267 = vsel %vm79, %v73, 0
  %v270 = vsel %vm79, %v74, 0
  %v273 = vsel %vm79, %v75, 0
  %v276 = vsel %vm79, %v76, 0
  %v279 = vsel %vm79, %v77, 0
  %v282 = vsel %vm79, %v78, 0
  %284 = vmatprep.subr.mxu0 0.0
  %285 = vmatpush1.xpose.msra.mxu0 %v273
  %286 = vmatprep.subr.mxu0 0.0
  %287 = vmatpush1.xpose.msra.mxu0 %v276
  %288 = vmatprep.subr.mxu0 0.0
  %289 = vmatpush1.xpose.msra.mxu0 %v279
  %290 = vmatprep.subr.mxu0 0.0
  %291 = vmatpush1.xpose.msra.mxu0 %v282
  %292 = vmatprep.subr.mxu0 0.0
  %293 = vmatpush1.xpose.msra.mxu0 0.0
  %294 = vmatprep.subr.mxu0 0.0
  %295 = vmatpush1.xpose.msra.mxu0 0.0
  %296 = vmatprep.subr.mxu0 0.0
  %297 = vmatpush1.xpose.msra.mxu0 0.0
  %298 = vmatprep.subr.mxu0 0.0
  %299 = vmatpush1.xpose.msra.mxu0 0.0
  %300 = vmatprep.subr.mxu0 0.0
  %301 = vmatpush1.xpose.msra.mxu0 0.0
  %302 = vmatprep.subr.mxu0 0.0
  %303 = vmatpush1.xpose.msra.mxu0 0.0
  %304 = vmatprep.subr.mxu0 0.0
  %305 = vmatpush1.xpose.msra.mxu0 0.0
  %306 = vmatprep.subr.mxu0 0.0
  %307 = vmatpush1.xpose.msra.mxu0 0.0
  %308 = vmatprep.subr.mxu0 0.0
  %309 = vmatpush1.xpose.msra.mxu0 0.0
  %310 = vmatprep.subr.mxu0 0.0
  %311 = vmatpush1.xpose.msra.mxu0 0.0
  %312 = vmatprep.subr.mxu0 0.0
  %313 = vmatpush1.xpose.msra.mxu0 0.0
  %314 = vmatprep.subr.mxu0 0.0
  %315 = vmatpush1.xpose.msra.mxu0 0.0
  %316 = vmatprep.subr.mxu0 0.0
  %317 = vmatpush1.xpose.msra.mxu0 0.0
  %318 = vmatprep.subr.mxu0 0.0
  %319 = vmatpush1.xpose.msra.mxu0 0.0
  %320 = vmatprep.subr.mxu0 0.0
  %321 = vmatpush1.xpose.msra.mxu0 0.0
  %322 = vmatprep.subr.mxu0 0.0
  %323 = vmatpush1.xpose.msra.mxu0 0.0
  %324 = vmatprep.subr.mxu0 0.0
  %325 = vmatpush1.xpose.msra.mxu0 0.0
  %326 = vmatprep.subr.mxu0 0.0
  %327 = vmatpush1.xpose.msra.mxu0 0.0
  %328 = vmatprep.subr.mxu0 0.0
  %329 = vmatpush1.xpose.msra.mxu0 0.0
  %330 = vmatprep.subr.mxu0 0.0
  %331 = vmatpush1.xpose.msra.mxu0 0.0
  %332 = vmatprep.subr.mxu0 0.0
  %333 = vmatpush1.xpose.msra.mxu0 0.0
  %334 = vmatprep.subr.mxu0 0.0
  %335 = vmatpush1.xpose.msra.mxu0 0.0
  %336 = vmatprep.subr.mxu0 0.0
  %337 = vmatpush1.xpose.msra.mxu0 0.0
  %338 = vmatprep.subr.mxu0 0.0
  %339 = vmatpush1.xpose.msra.mxu0 0.0
  %340 = vmatprep.subr.mxu0 0.0
  %341 = vmatpush1.xpose.msra.mxu0 0.0
  %342 = vmatprep.subr.mxu0 0.0
  %343 = vmatpush1.xpose.msra.mxu0 0.0
  %344 = vmatprep.subr.mxu0 0.0
  %345 = vmatpush1.xpose.msra.mxu0 0.0
  %346 = vmatprep.subr.mxu0 0.0
  %347 = vmatpush1.xpose.msra.mxu0 0.0
  %348 = vmatprep.mubr.f32.mxu0 0.0
  %349 = vmatmul.mubr.f32.gmra.mrb[0].mxu0 %v81
  %v350 = vpop.f32.mrb[0].mxu0
  %v351 = vadd.f32 0.0, %v350
  %v352 = vpop.f32.mrb[0].mxu0
  %353 = vmatprep.mubr.f32.mxu0 0.0
  %354 = vmatmul.mubr.f32.gmra.mrb[0].mxu0 %v84
  %v355 = vpop.f32.mrb[0].mxu0
  %v356 = vadd.f32 0.0, %v355
  %v357 = vpop.f32.mrb[0].mxu0
  %358 = vmatprep.mubr.f32.mxu0 0.0
  %359 = vmatmul.mubr.f32.gmra.mrb[0].mxu0 %v87
  %v360 = vpop.f32.mrb[0].mxu0
  %v361 = vadd.f32 0.0, %v360
  %v362 = vpop.f32.mrb[0].mxu0
  %363 = vmatprep.mubr.f32.mxu0 0.0
  %364 = vmatmul.mubr.f32.gmra.mrb[0].mxu0 %v90
  %v365 = vpop.f32.mrb[0].mxu0
  %v366 = vadd.f32 0.0, %v365
  %v367 = vpop.f32.mrb[0].mxu0
  %368 = vmatprep.mubr.f32.mxu0 0.0
  %369 = vmatmul.mubr.f32.gmra.mrb[0].mxu0 %v93
  %v370 = vpop.f32.mrb[0].mxu0
  %v371 = vadd.f32 0.0, %v370
  %v372 = vpop.f32.mrb[0].mxu0
  %373 = vmatprep.mubr.f32.mxu0 0.0
  %374 = vmatmul.mubr.f32.gmra.mrb[0].mxu0 %v96
  %v375 = vpop.f32.mrb[0].mxu0
  %v376 = vadd.f32 0.0, %v375
  %v377 = vpop.f32.mrb[0].mxu0
  %378 = vmatprep.mubr.f32.mxu0 0.0
  %379 = vmatmul.mubr.f32.gmra.mrb[0].mxu0 %v99
  %v380 = vpop.f32.mrb[0].mxu0
  %v381 = vadd.f32 0.0, %v380
  %v382 = vpop.f32.mrb[0].mxu0
  %383 = vmatprep.mubr.f32.mxu0 0.0
  %384 = vmatmul.mubr.f32.gmra.mrb[0].mxu0 %v102
  %v385 = vpop.f32.mrb[0].mxu0
  %v386 = vadd.f32 0.0, %v385
  %v387 = vpop.f32.mrb[0].mxu0
  %388 = vmatprep.mubr.f32.mxu0 0.0
  %389 = vmatmul.mubr.f32.gmra.mrb[0].mxu0 %v105
  %v390 = vpop.f32.mrb[0].mxu0
  %v391 = vadd.f32 0.0, %v390
  %v392 = vpop.f32.mrb[0].mxu0
  %393 = vmatprep.mubr.f32.mxu0 0.0
  %394 = vmatmul.mubr.f32.gmra.mrb[0].mxu0 %v108
  %v395 = vpop.f32.mrb[0].mxu0
  %v396 = vadd.f32 0.0, %v395
  %v397 = vpop.f32.mrb[0].mxu0
  %398 = vmatprep.mubr.f32.mxu0 0.0
  %399 = vmatmul.mubr.f32.gmra.mrb[0].mxu0 %v111
  %v400 = vpop.f32.mrb[0].mxu0
  %v401 = vadd.f32 0.0, %v400
  %v402 = vpop.f32.mrb[0].mxu0
  %403 = vmatprep.mubr.f32.mxu0 0.0
  %404 = vmatmul.mubr.f32.gmra.mrb[0].mxu0 %v114
  %v405 = vpop.f32.mrb[0].mxu0
  %v406 = vadd.f32 0.0, %v405
  %v407 = vpop.f32.mrb[0].mxu0
  %408 = vmatprep.mubr.f32.mxu0 0.0
  %409 = vmatmul.mubr.f32.gmra.mrb[0].mxu0 %v117
  %v410 = vpop.f32.mrb[0].mxu0
  %v411 = vadd.f32 0.0, %v410
  %v412 = vpop.f32.mrb[0].mxu0
  %413 = vmatprep.mubr.f32.mxu0 0.0
  %414 = vmatmul.mubr.f32.gmra.mrb[0].mxu0 %v120
  %v415 = vpop.f32.mrb[0].mxu0
  %v416 = vadd.f32 0.0, %v415
  %v417 = vpop.f32.mrb[0].mxu0
  %418 = vmatprep.mubr.f32.mxu0 0.0
  %419 = vmatmul.mubr.f32.gmra.mrb[0].mxu0 %v123
  %v420 = vpop.f32.mrb[0].mxu0
  %v421 = vadd.f32 0.0, %v420
  %v422 = vpop.f32.mrb[0].mxu0
  %423 = vmatprep.mubr.f32.mxu0 0.0
  %424 = vmatmul.mubr.f32.gmra.mrb[0].mxu0 %v126
  %v425 = vpop.f32.mrb[0].mxu0
  %v426 = vadd.f32 0.0, %v425
  %v427 = vpop.f32.mrb[0].mxu0
  %428 = vmatprep.mubr.f32.mxu0 0.0
  %429 = vmatmul.mubr.f32.gmra.mrb[0].mxu0 %v129
  %v430 = vpop.f32.mrb[0].mxu0
  %v431 = vadd.f32 0.0, %v430
  %v432 = vpop.f32.mrb[0].mxu0
  %433 = vmatprep.mubr.f32.mxu0 0.0
  %434 = vmatmul.mubr.f32.gmra.mrb[0].mxu0 %v132
  %v435 = vpop.f32.mrb[0].mxu0
  %v436 = vadd.f32 0.0, %v435
  %v437 = vpop.f32.mrb[0].mxu0
  %438 = vmatprep.mubr.f32.mxu0 0.0
  %439 = vmatmul.mubr.f32.gmra.mrb[0].mxu0 %v135
  %v440 = vpop.f32.mrb[0].mxu0
  %v441 = vadd.f32 0.0, %v440
  %v442 = vpop.f32.mrb[0].mxu0
  %443 = vmatprep.mubr.f32.mxu0 0.0
  %444 = vmatmul.mubr.f32.gmra.mrb[0].mxu0 %v138
  %v445 = vpop.f32.mrb[0].mxu0
  %v446 = vadd.f32 0.0, %v445
  %v447 = vpop.f32.mrb[0].mxu0
  %448 = vmatprep.mubr.f32.mxu0 0.0
  %449 = vmatmul.mubr.f32.gmra.mrb[0].mxu0 %v141
  %v450 = vpop.f32.mrb[0].mxu0
  %v451 = vadd.f32 0.0, %v450
  %v452 = vpop.f32.mrb[0].mxu0
  %453 = vmatprep.mubr.f32.mxu0 0.0
  %454 = vmatmul.mubr.f32.gmra.mrb[0].mxu0 %v144
  %v455 = vpop.f32.mrb[0].mxu0
  %v456 = vadd.f32 0.0, %v455
  %v457 = vpop.f32.mrb[0].mxu0
  %458 = vmatprep.mubr.f32.mxu0 0.0
  %459 = vmatmul.mubr.f32.gmra.mrb[0].mxu0 %v147
  %v460 = vpop.f32.mrb[0].mxu0
  %v461 = vadd.f32 0.0, %v460
  %v462 = vpop.f32.mrb[0].mxu0
  %463 = vmatprep.mubr.f32.mxu0 0.0
  %464 = vmatmul.mubr.f32.gmra.mrb[0].mxu0 %v150
  %v465 = vpop.f32.mrb[0].mxu0
  %v466 = vadd.f32 0.0, %v465
  %v467 = vpop.f32.mrb[0].mxu0
  %468 = vmatprep.mubr.f32.mxu0 0.0
  %469 = vmatmul.mubr.f32.gmra.mrb[0].mxu0 %v153
  %v470 = vpop.f32.mrb[0].mxu0
  %v471 = vadd.f32 0.0, %v470
  %v472 = vpop.f32.mrb[0].mxu0
  %473 = vmatprep.mubr.f32.mxu0 0.0
  %474 = vmatmul.mubr.f32.gmra.mrb[0].mxu0 %v156
  %v475 = vpop.f32.mrb[0].mxu0
  %v476 = vadd.f32 0.0, %v475
  %v477 = vpop.f32.mrb[0].mxu0
  %478 = vmatprep.mubr.f32.mxu0 0.0
  %479 = vmatmul.mubr.f32.gmra.mrb[0].mxu0 %v159
  %v480 = vpop.f32.mrb[0].mxu0
  %v481 = vadd.f32 0.0, %v480
  %v482 = vpop.f32.mrb[0].mxu0
  %483 = vmatprep.mubr.f32.mxu0 0.0
  %484 = vmatmul.mubr.f32.gmra.mrb[0].mxu0 %v162
  %v485 = vpop.f32.mrb[0].mxu0
  %v486 = vadd.f32 0.0, %v485
  %v487 = vpop.f32.mrb[0].mxu0
  %488 = vmatprep.mubr.f32.mxu0 0.0
  %489 = vmatmul.mubr.f32.gmra.mrb[0].mxu0 %v165
  %v490 = vpop.f32.mrb[0].mxu0
  %v491 = vadd.f32 0.0, %v490
  %v492 = vpop.f32.mrb[0].mxu0
  %493 = vmatprep.mubr.f32.mxu0 0.0
  %494 = vmatmul.mubr.f32.gmra.mrb[0].mxu0 %v168
  %v495 = vpop.f32.mrb[0].mxu0
  %v496 = vadd.f32 0.0, %v495
  %v497 = vpop.f32.mrb[0].mxu0
  %498 = vmatprep.mubr.f32.mxu0 0.0
  %499 = vmatmul.mubr.f32.gmra.mrb[0].mxu0 %v171
  %v500 = vpop.f32.mrb[0].mxu0
  %v501 = vadd.f32 0.0, %v500
  %v502 = vpop.f32.mrb[0].mxu0
  %503 = vmatprep.mubr.f32.mxu0 0.0
  %504 = vmatmul.mubr.f32.gmra.mrb[0].mxu0 %v174
  %v505 = vpop.f32.mrb[0].mxu0
  %v506 = vadd.f32 0.0, %v505
  %v507 = vpop.f32.mrb[0].mxu0
  %508 = vmatprep.mubr.f32.mxu0 0.0
  %509 = vmatmul.mubr.f32.gmra.mrb[0].mxu0 %v177
  %v510 = vpop.f32.mrb[0].mxu0
  %v511 = vadd.f32 0.0, %v510
  %v512 = vpop.f32.mrb[0].mxu0
  %513 = vmatprep.mubr.f32.mxu0 0.0
  %514 = vmatmul.mubr.f32.gmra.mrb[0].mxu0 %v180
  %v515 = vpop.f32.mrb[0].mxu0
  %v516 = vadd.f32 0.0, %v515
  %v517 = vpop.f32.mrb[0].mxu0
  %518 = vmatprep.mubr.f32.mxu0 0.0
  %519 = vmatmul.mubr.f32.gmra.mrb[0].mxu0 %v183
  %v520 = vpop.f32.mrb[0].mxu0
  %v521 = vadd.f32 0.0, %v520
  %v522 = vpop.f32.mrb[0].mxu0
  %523 = vmatprep.mubr.f32.mxu0 0.0
  %524 = vmatmul.mubr.f32.gmra.mrb[0].mxu0 %v186
  %v525 = vpop.f32.mrb[0].mxu0
  %v526 = vadd.f32 0.0, %v525
  %v527 = vpop.f32.mrb[0].mxu0
  %528 = vmatprep.mubr.f32.mxu0 0.0
  %529 = vmatmul.mubr.f32.gmra.mrb[0].mxu0 %v189
  %v530 = vpop.f32.mrb[0].mxu0
  %v531 = vadd.f32 0.0, %v530
  %v532 = vpop.f32.mrb[0].mxu0
  %533 = vmatprep.mubr.f32.mxu0 0.0
  %534 = vmatmul.mubr.f32.gmra.mrb[0].mxu0 %v192
  %v535 = vpop.f32.mrb[0].mxu0
  %v536 = vadd.f32 0.0, %v535
  %v537 = vpop.f32.mrb[0].mxu0
  %538 = vmatprep.mubr.f32.mxu0 0.0
  %539 = vmatmul.mubr.f32.gmra.mrb[0].mxu0 %v195
  %v540 = vpop.f32.mrb[0].mxu0
  %v541 = vadd.f32 0.0, %v540
  %v542 = vpop.f32.mrb[0].mxu0
  %543 = vmatprep.mubr.f32.mxu0 0.0
  %544 = vmatmul.mubr.f32.gmra.mrb[0].mxu0 %v198
  %v545 = vpop.f32.mrb[0].mxu0
  %v546 = vadd.f32 0.0, %v545
  %v547 = vpop.f32.mrb[0].mxu0
  %548 = vmatprep.mubr.f32.mxu0 0.0
  %549 = vmatmul.mubr.f32.gmra.mrb[0].mxu0 %v201
  %v550 = vpop.f32.mrb[0].mxu0
  %v551 = vadd.f32 0.0, %v550
  %v552 = vpop.f32.mrb[0].mxu0
  %553 = vmatprep.mubr.f32.mxu0 0.0
  %554 = vmatmul.mubr.f32.gmra.mrb[0].mxu0 %v204
  %v555 = vpop.f32.mrb[0].mxu0
  %v556 = vadd.f32 0.0, %v555
  %v557 = vpop.f32.mrb[0].mxu0
  %558 = vmatprep.mubr.f32.mxu0 0.0
  %559 = vmatmul.mubr.f32.gmra.mrb[0].mxu0 %v207
  %v560 = vpop.f32.mrb[0].mxu0
  %v561 = vadd.f32 0.0, %v560
  %v562 = vpop.f32.mrb[0].mxu0
  %563 = vmatprep.mubr.f32.mxu0 0.0
  %564 = vmatmul.mubr.f32.gmra.mrb[0].mxu0 %v210
  %v565 = vpop.f32.mrb[0].mxu0
  %v566 = vadd.f32 0.0, %v565
  %v567 = vpop.f32.mrb[0].mxu0
  %568 = vmatprep.mubr.f32.mxu0 0.0
  %569 = vmatmul.mubr.f32.gmra.mrb[0].mxu0 %v213
  %v570 = vpop.f32.mrb[0].mxu0
  %v571 = vadd.f32 0.0, %v570
  %v572 = vpop.f32.mrb[0].mxu0
  %573 = vmatprep.mubr.f32.mxu0 0.0
  %574 = vmatmul.mubr.f32.gmra.mrb[0].mxu0 %v216
  %v575 = vpop.f32.mrb[0].mxu0
  %v576 = vadd.f32 0.0, %v575
  %v577 = vpop.f32.mrb[0].mxu0
  %578 = vmatprep.mubr.f32.mxu0 0.0
  %579 = vmatmul.mubr.f32.gmra.mrb[0].mxu0 %v219
  %v580 = vpop.f32.mrb[0].mxu0
  %v581 = vadd.f32 0.0, %v580
  %v582 = vpop.f32.mrb[0].mxu0
  %583 = vmatprep.mubr.f32.mxu0 0.0
  %584 = vmatmul.mubr.f32.gmra.mrb[0].mxu0 %v222
  %v585 = vpop.f32.mrb[0].mxu0
  %v586 = vadd.f32 0.0, %v585
  %v587 = vpop.f32.mrb[0].mxu0
  %588 = vmatprep.mubr.f32.mxu0 0.0
  %589 = vmatmul.mubr.f32.gmra.mrb[0].mxu0 %v225
  %v590 = vpop.f32.mrb[0].mxu0
  %v591 = vadd.f32 0.0, %v590
  %v592 = vpop.f32.mrb[0].mxu0
  %593 = vmatprep.mubr.f32.mxu0 0.0
  %594 = vmatmul.mubr.f32.gmra.mrb[0].mxu0 %v228
  %v595 = vpop.f32.mrb[0].mxu0
  %v596 = vadd.f32 0.0, %v595
  %v597 = vpop.f32.mrb[0].mxu0
  %598 = vmatprep.mubr.f32.mxu0 0.0
  %599 = vmatmul.mubr.f32.gmra.mrb[0].mxu0 %v231
  %v600 = vpop.f32.mrb[0].mxu0
  %v601 = vadd.f32 0.0, %v600
  %v602 = vpop.f32.mrb[0].mxu0
  %603 = vmatprep.mubr.f32.mxu0 0.0
  %604 = vmatmul.mubr.f32.gmra.mrb[0].mxu0 %v234
  %v605 = vpop.f32.mrb[0].mxu0
  %v606 = vadd.f32 0.0, %v605
  %v607 = vpop.f32.mrb[0].mxu0
  %608 = vmatprep.mubr.f32.mxu0 0.0
  %609 = vmatmul.mubr.f32.gmra.mrb[0].mxu0 %v237
  %v610 = vpop.f32.mrb[0].mxu0
  %v611 = vadd.f32 0.0, %v610
  %v612 = vpop.f32.mrb[0].mxu0
  %613 = vmatprep.mubr.f32.mxu0 0.0
  %614 = vmatmul.mubr.f32.gmra.mrb[0].mxu0 %v240
  %v615 = vpop.f32.mrb[0].mxu0
  %v616 = vadd.f32 0.0, %v615
  %v617 = vpop.f32.mrb[0].mxu0
  %618 = vmatprep.mubr.f32.mxu0 0.0
  %619 = vmatmul.mubr.f32.gmra.mrb[0].mxu0 %v243
  %v620 = vpop.f32.mrb[0].mxu0
  %v621 = vadd.f32 0.0, %v620
  %v622 = vpop.f32.mrb[0].mxu0
  %623 = vmatprep.mubr.f32.mxu0 0.0
  %624 = vmatmul.mubr.f32.gmra.mrb[0].mxu0 %v246
  %v625 = vpop.f32.mrb[0].mxu0
  %v626 = vadd.f32 0.0, %v625
  %v627 = vpop.f32.mrb[0].mxu0
  %628 = vmatprep.mubr.f32.mxu0 0.0
  %629 = vmatmul.mubr.f32.gmra.mrb[0].mxu0 %v249
  %v630 = vpop.f32.mrb[0].mxu0
  %v631 = vadd.f32 0.0, %v630
  %v632 = vpop.f32.mrb[0].mxu0
  %633 = vmatprep.mubr.f32.mxu0 0.0
  %634 = vmatmul.mubr.f32.gmra.mrb[0].mxu0 %v252
  %v635 = vpop.f32.mrb[0].mxu0
  %v636 = vadd.f32 0.0, %v635
  %v637 = vpop.f32.mrb[0].mxu0
  %638 = vmatprep.mubr.f32.mxu0 0.0
  %639 = vmatmul.mubr.f32.gmra.mrb[0].mxu0 %v255
  %v640 = vpop.f32.mrb[0].mxu0
  %v641 = vadd.f32 0.0, %v640
  %v642 = vpop.f32.mrb[0].mxu0
  %643 = vmatprep.mubr.f32.mxu0 0.0
  %644 = vmatmul.mubr.f32.gmra.mrb[0].mxu0 %v258
  %v645 = vpop.f32.mrb[0].mxu0
  %v646 = vadd.f32 0.0, %v645
  %v647 = vpop.f32.mrb[0].mxu0
  %648 = vmatprep.mubr.f32.mxu0 0.0
  %649 = vmatmul.mubr.f32.gmra.mrb[0].mxu0 %v261
  %v650 = vpop.f32.mrb[0].mxu0
  %v651 = vadd.f32 0.0, %v650
  %v652 = vpop.f32.mrb[0].mxu0
  %653 = vmatprep.mubr.f32.mxu0 0.0
  %654 = vmatmul.mubr.f32.gmra.mrb[0].mxu0 %v264
  %v655 = vpop.f32.mrb[0].mxu0
  %v656 = vadd.f32 0.0, %v655
  %v657 = vpop.f32.mrb[0].mxu0
  %658 = vmatprep.mubr.f32.mxu0 0.0
  %659 = vmatmul.mubr.f32.gmra.mrb[0].mxu0 %v267
  %v660 = vpop.f32.mrb[0].mxu0
  %v661 = vadd.f32 0.0, %v660
  %v662 = vpop.f32.mrb[0].mxu0
  %663 = vmatprep.mubr.f32.mxu0 0.0
  %664 = vmatmul.mubr.f32.gmra.mrb[0].mxu0 %v270
  %v665 = vpop.f32.mrb[0].mxu0
  %v666 = vadd.f32 0.0, %v665
  %v667 = vpop.f32.mrb[0].mxu0
  %668 = vdwg.mxu0
  %669 = vst.msk [vmem:[%s2] sm:$0xff] %vm79, %v351
  %670 = vst.msk [vmem:[%s2 + $0x8] sm:$0xff] %vm79, %v356
  %671 = vst.msk [vmem:[%s2 + $0x10] sm:$0xff] %vm79, %v361
  %672 = vst.msk [vmem:[%s2 + $0x18] sm:$0xff] %vm79, %v366
  %673 = vst.msk [vmem:[%s2 + $0x20] sm:$0xff] %vm79, %v371
  %674 = vst.msk [vmem:[%s2 + $0x28] sm:$0xff] %vm79, %v376
  %675 = vst.msk [vmem:[%s2 + $0x30] sm:$0xff] %vm79, %v381
  %676 = vst.msk [vmem:[%s2 + $0x38] sm:$0xff] %vm79, %v386
  %677 = vst.msk [vmem:[%s2 + $0x40] sm:$0xff] %vm79, %v391
  %678 = vst.msk [vmem:[%s2 + $0x48] sm:$0xff] %vm79, %v396
  %679 = vst.msk [vmem:[%s2 + $0x50] sm:$0xff] %vm79, %v401
  %680 = vst.msk [vmem:[%s2 + $0x58] sm:$0xff] %vm79, %v406
  %681 = vst.msk [vmem:[%s2 + $0x60] sm:$0xff] %vm79, %v411
  %682 = vst.msk [vmem:[%s2 + $0x68] sm:$0xff] %vm79, %v416
  %683 = vst.msk [vmem:[%s2 + $0x70] sm:$0xff] %vm79, %v421
  %684 = vst.msk [vmem:[%s2 + $0x78] sm:$0xff] %vm79, %v426
  %685 = vst.msk [vmem:[%s2 + $0x80] sm:$0xff] %vm79, %v431
  %686 = vst.msk [vmem:[%s2 + $0x88] sm:$0xff] %vm79, %v436
  %687 = vst.msk [vmem:[%s2 + $0x90] sm:$0xff] %vm79, %v441
  %688 = vst.msk [vmem:[%s2 + $0x98] sm:$0xff] %vm79, %v446
  %689 = vst.msk [vmem:[%s2 + $0xa0] sm:$0xff] %vm79, %v451
  %690 = vst.msk [vmem:[%s2 + $0xa8] sm:$0xff] %vm79, %v456
  %691 = vst.msk [vmem:[%s2 + $0xb0] sm:$0xff] %vm79, %v461
  %692 = vst.msk [vmem:[%s2 + $0xb8] sm:$0xff] %vm79, %v466
  %693 = vst.msk [vmem:[%s2 + $0xc0] sm:$0xff] %vm79, %v471
  %694 = vst.msk [vmem:[%s2 + $0xc8] sm:$0xff] %vm79, %v476
  %695 = vst.msk [vmem:[%s2 + $0xd0] sm:$0xff] %vm79, %v481
  %696 = vst.msk [vmem:[%s2 + $0xd8] sm:$0xff] %vm79, %v486
  %697 = vst.msk [vmem:[%s2 + $0xe0] sm:$0xff] %vm79, %v491
  %698 = vst.msk [vmem:[%s2 + $0xe8] sm:$0xff] %vm79, %v496
  %699 = vst.msk [vmem:[%s2 + $0xf0] sm:$0xff] %vm79, %v501
  %700 = vst.msk [vmem:[%s2 + $0xf8] sm:$0xff] %vm79, %v506
  %701 = vst.msk [vmem:[%s2 + $0x100] sm:$0xff] %vm79, %v511
  %702 = vst.msk [vmem:[%s2 + $0x108] sm:$0xff] %vm79, %v516
  %703 = vst.msk [vmem:[%s2 + $0x110] sm:$0xff] %vm79, %v521
  %704 = vst.msk [vmem:[%s2 + $0x118] sm:$0xff] %vm79, %v526
  %705 = vst.msk [vmem:[%s2 + $0x120] sm:$0xff] %vm79, %v531
  %706 = vst.msk [vmem:[%s2 + $0x128] sm:$0xff] %vm79, %v536
  %707 = vst.msk [vmem:[%s2 + $0x130] sm:$0xff] %vm79, %v541
  %708 = vst.msk [vmem:[%s2 + $0x138] sm:$0xff] %vm79, %v546
  %709 = vst.msk [vmem:[%s2 + $0x140] sm:$0xff] %vm79, %v551
  %710 = vst.msk [vmem:[%s2 + $0x148] sm:$0xff] %vm79, %v556
  %711 = vst.msk [vmem:[%s2 + $0x150] sm:$0xff] %vm79, %v561
  %712 = vst.msk [vmem:[%s2 + $0x158] sm:$0xff] %vm79, %v566
  %713 = vst.msk [vmem:[%s2 + $0x160] sm:$0xff] %vm79, %v571
  %714 = vst.msk [vmem:[%s2 + $0x168] sm:$0xff] %vm79, %v576
  %715 = vst.msk [vmem:[%s2 + $0x170] sm:$0xff] %vm79, %v581
  %716 = vst.msk [vmem:[%s2 + $0x178] sm:$0xff] %vm79, %v586
  %717 = vst.msk [vmem:[%s2 + $0x180] sm:$0xff] %vm79, %v591
  %718 = vst.msk [vmem:[%s2 + $0x188] sm:$0xff] %vm79, %v596
  %719 = vst.msk [vmem:[%s2 + $0x190] sm:$0xff] %vm79, %v601
  %720 = vst.msk [vmem:[%s2 + $0x198] sm:$0xff] %vm79, %v606
  %721 = vst.msk [vmem:[%s2 + $0x1a0] sm:$0xff] %vm79, %v611
  %722 = vst.msk [vmem:[%s2 + $0x1a8] sm:$0xff] %vm79, %v616
  %723 = vst.msk [vmem:[%s2 + $0x1b0] sm:$0xff] %vm79, %v621
  %724 = vst.msk [vmem:[%s2 + $0x1b8] sm:$0xff] %vm79, %v626
  %725 = vst.msk [vmem:[%s2 + $0x1c0] sm:$0xff] %vm79, %v631
  %726 = vst.msk [vmem:[%s2 + $0x1c8] sm:$0xff] %vm79, %v636
  %727 = vst.msk [vmem:[%s2 + $0x1d0] sm:$0xff] %vm79, %v641
  %728 = vst.msk [vmem:[%s2 + $0x1d8] sm:$0xff] %vm79, %v646
  %729 = vst.msk [vmem:[%s2 + $0x1e0] sm:$0xff] %vm79, %v651
  %730 = vst.msk [vmem:[%s2 + $0x1e8] sm:$0xff] %vm79, %v656
  %731 = vst.msk [vmem:[%s2 + $0x1f0] sm:$0xff] %vm79, %v661
  %732 = vst.msk [vmem:[%s2 + $0x1f8] sm:$0xff] %vm79, %v666
  // Predicated region
  $region10: #{tpu_custom_call.1} parent=0 // pred_check
    _
  $region11: #{tpu_custom_call.1} parent=0 // pred_check_branch
    %734 = sbr.rel (0) target = $region13
  $region12: #{tpu_custom_call.1} parent=0 // pred_region
    _
  $region13: #{tpu_custom_call.1} parent=0 // pred_fallthru
    _
  // Predicated region
  $region14: #{tpu_custom_call.1} parent=0 // pred_check
    _
  $region15: #{tpu_custom_call.1} parent=0 // pred_check_branch
    %736 = sbr.rel (0) target = $region17
  $region16: #{tpu_custom_call.1} parent=0 // pred_region
    _
  $region17: #{tpu_custom_call.1} parent=0 // pred_fallthru
    _

</llo_original>
